<compile_context>
chip_gen: v7x
topology: tpu7x:2x2x1
jax: 0.10.0
libtpu: 0.0.40
codegen_flags: <defaults>
</compile_context>

<pallas_src>
import functools
import math

import jax
import jax.numpy as jnp
from jax.experimental import pallas as pl
from jax.experimental.pallas import tpu as pltpu

_LANES = 128


def _ceil_div(a, b):
    return -(-a // b)


def _round_up(a, b):
    return _ceil_div(a, b) * b


def _naive_loss_kernel(thresh, filter_p, use_weight, *refs):
    if use_weight:
        pred_ref, tgt_ref, w_ref, out_ref = refs
    else:
        pred_ref, tgt_ref, out_ref = refs
        w_ref = None

    t_idx = pl.program_id(1)

    @pl.when(t_idx == 0)
    def _():
        out_ref[...] = jnp.zeros_like(out_ref)

    x = pred_ref[...].astype(jnp.float32)
    t = tgt_ref[...].astype(jnp.float32)

    if use_weight:
        # Weighted path: weight multiplies the probability inside the log, so the
        # logits-form identity does not apply -> keep sigmoid + clamped logs.
        w = w_ref[...].astype(jnp.float32)
        p = jax.nn.sigmoid(x) * w
        t = t * w
        mask = jnp.logical_or(jnp.logical_and(p < filter_p, t > 0.5),
                              jnp.logical_and(p > filter_p, t < 0.5))
        log_p = jnp.maximum(jnp.log(p), -100.0)
        log_1mp = jnp.maximum(jnp.log(1.0 - p), -100.0)
        bce = -(t * log_p + (1.0 - t) * log_1mp)
    else:
        # Unweighted path: mask via logits vs logit(filter_p); BCE from logits with a single
        # exp + log1p per element. The -100 clamp of torch.nn.BCELoss is preserved on both
        # log terms:  log(p) = -(max(-x,0)+s),  log(1-p) = -(max(x,0)+s),  s = log1p(exp(-|x|)).
        mask = jnp.logical_or(jnp.logical_and(x < thresh, t > 0.5),
                              jnp.logical_and(x > thresh, t < 0.5))
        s = jnp.log1p(jnp.exp(-jnp.abs(x)))
        log_p = jnp.maximum(-(jnp.maximum(-x, 0.0) + s), -100.0)
        log_1mp = jnp.maximum(-(jnp.maximum(x, 0.0) + s), -100.0)
        bce = -(t * log_p + (1.0 - t) * log_1mp)

    bce = jnp.where(mask, bce, 0.0)

    # VPU-only accumulation into the VMEM-resident (1, 8, 128) output block.
    out_ref[0] += bce.reshape(-1, 8, _LANES).sum(axis=0)


def naive_loss(pred, target, weight=None, *, filter_p=0.5,
               max_tile_rows=1024, num_partitions=2):
    """pred, target (and optional weight): same-shaped arrays; pred holds logits."""
    orig_dtype = pred.dtype
    use_weight = weight is not None and weight.shape == pred.shape

    # Flatten to a lane-dense (rows, 128) slab, padding with mask-excluded values.
    pred_flat = pred.reshape(-1).astype(jnp.float32)
    tgt_flat = target.reshape(-1).astype(jnp.float32)
    total = pred_flat.shape[0]

    P = num_partitions
    rows_needed = _ceil_div(total, _LANES)
    tile_rows = min(max_tile_rows, _round_up(_ceil_div(rows_needed, P), 8))
    T = _ceil_div(rows_needed, P * tile_rows)
    padded_rows = P * T * tile_rows
    pad = padded_rows * _LANES - total

    # pad values: logits=0, target=0.5, weight=1.0  ->  mask is False on padding.
    pred2d = jnp.pad(pred_flat, (0, pad), constant_values=0.0).reshape(padded_rows, _LANES)
    tgt2d = jnp.pad(tgt_flat, (0, pad), constant_values=0.5).reshape(padded_rows, _LANES)
    inputs = [pred2d, tgt2d]
    if use_weight:
        w2d = jnp.pad(weight.reshape(-1).astype(jnp.float32), (0, pad),
                      constant_values=1.0).reshape(padded_rows, _LANES)
        inputs.append(w2d)
    num_in = len(inputs)

    fp = min(max(float(filter_p), 1e-6), 1.0 - 1e-6)
    thresh = math.log(fp / (1.0 - fp))

    in_spec = pl.BlockSpec((tile_rows, _LANES), lambda p, t: (p * T + t, 0))
    out_spec = pl.BlockSpec((1, 8, _LANES), lambda p, t: (p, 0, 0))

    # Explicit VMEM budget: double-buffered input blocks + headroom for output/internal scratch.
    block_bytes = tile_rows * _LANES * 4
    vmem_limit = min(max(4 * num_in * block_bytes, 16 << 20), 96 << 20)

    kernel = functools.partial(_naive_loss_kernel, thresh, float(filter_p), use_weight)

    partials = pl.pallas_call(
        kernel,
        out_shape=jax.ShapeDtypeStruct((P, 8, _LANES), jnp.float32),
        grid_spec=pltpu.PrefetchScalarGridSpec(
            num_scalar_prefetch=0,
            grid=(P, T),
            in_specs=[in_spec] * num_in,
            out_specs=out_spec,
        ),
        compiler_params=pltpu.CompilerParams(
            dimension_semantics=("parallel", "arbitrary"),
            vmem_limit_bytes=vmem_limit,
        ),
    )(*inputs)

    # Final tiny cross-lane reduce (P*8*128 elements) in XLA.
    return jnp.sum(partials).reshape(1).astype(orig_dtype)


def naive_loss_ref(pred, target, weight=None, filter_p=0.5):
    """Pure-JAX reference mirroring the PyTorch module (BCELoss sum, Sigmoid)."""
    p = jax.nn.sigmoid(pred.astype(jnp.float32))
    t = target.astype(jnp.float32)
    if weight is not None and weight.shape == pred.shape:
        w = weight.astype(jnp.float32)
        p = p * w
        t = t * w
    mask = jnp.logical_or(jnp.logical_and(p < filter_p, t > 0.5),
                          jnp.logical_and(p > filter_p, t < 0.5))
    bce = -(t * jnp.maximum(jnp.log(p), -100.0)
            + (1.0 - t) * jnp.maximum(jnp.log(1.0 - p), -100.0))
    return jnp.sum(jnp.where(mask, bce, 0.0)).reshape(1)


if __name__ == "__main__":
    key = jax.random.PRNGKey(0)
    k1, k2, k3, k4, k5 = jax.random.split(key, 5)

    # Case 1: lane-aligned shape, unweighted.
    H, W = 16, 128
    pred = jax.random.normal(k1, (1, 1, H, W), dtype=jnp.float32) * 2.0   # logits
    target = (jax.random.uniform(k2, (1, 1, H, W)) > 0.5).astype(jnp.float32)
    out = jax.block_until_ready(naive_loss(pred, target, filter_p=0.5))
    ref = naive_loss_ref(pred, target, filter_p=0.5)
    assert out.shape == (1,)
    assert jnp.allclose(out, ref, rtol=1e-4, atol=1e-3), (out, ref)

    # Case 2: ragged shape + non-default filter_p (exercises padding / logit threshold).
    H2, W2 = 13, 57
    pred2 = jax.random.normal(k3, (1, 1, H2, W2), dtype=jnp.float32) * 3.0
    target2 = (jax.random.uniform(k4, (1, 1, H2, W2)) > 0.5).astype(jnp.float32)
    out2 = jax.block_until_ready(naive_loss(pred2, target2, filter_p=0.3))
    ref2 = naive_loss_ref(pred2, target2, filter_p=0.3)
    assert jnp.allclose(out2, ref2, rtol=1e-4, atol=1e-3), (out2, ref2)

    # Case 3: weighted path (sigmoid formulation inside the kernel).
    weight = jax.random.uniform(k5, (1, 1, H, W), dtype=jnp.float32)
    out3 = jax.block_until_ready(naive_loss(pred, target, weight, filter_p=0.5))
    ref3 = naive_loss_ref(pred, target, weight, filter_p=0.5)
    assert jnp.allclose(out3, ref3, rtol=1e-4, atol=1e-3), (out3, ref3)

    print("KERNEL_OK")
</pallas_src>

<mosaic_0001>
module attributes {stable_mosaic.version = 11 : i64} {
  func.func @_naive_loss_kernel(%arg0: i32, %arg1: i32, %arg2: memref<8x128xf32, #tpu.memory_space<vmem>>, %arg3: memref<8x128xf32, #tpu.memory_space<vmem>>, %arg4: memref<1x8x128xf32, #tpu.memory_space<vmem>>) attributes {dimension_semantics = [#tpu.dimension_semantics<parallel>, #tpu.dimension_semantics<arbitrary>], iteration_bounds = array<i64: 2, 1>, scalar_prefetch = 0 : i64, scratch_operands = 0 : i64, tpu.core_type = #tpu.core_type<tc>, window_params = [{transform_indices = @transform_0, window_bounds = array<i64: 8, 128>}, {transform_indices = @transform_1, window_bounds = array<i64: 8, 128>}, {transform_indices = @transform_2, window_bounds = array<i64: 1, 8, 128>}]} {
    %c0_i32 = arith.constant 0 : i32
    %0 = arith.cmpi eq, %arg1, %c0_i32 : i32
    %1 = arith.extui %0 : i1 to i32
    %c0_i32_0 = arith.constant 0 : i32
    %2 = arith.cmpi ne, %1, %c0_i32_0 : i32
    scf.if %2 {
      %cst_25 = arith.constant 0.000000e+00 : f32
      %54 = vector.broadcast %cst_25 : f32 to vector<1x8x128xf32>
      %c0_26 = arith.constant 0 : index
      %c0_27 = arith.constant 0 : index
      %c0_28 = arith.constant 0 : index
      %55 = vector.load %arg4[%c0_26, %c0_27, %c0_28] : memref<1x8x128xf32, #tpu.memory_space<vmem>>, vector<1x8x128xf32>
      tpu.vector_store %arg4[%c0_26, %c0_27, %c0_28], %54 {strides = array<i32>} : memref<1x8x128xf32, #tpu.memory_space<vmem>>, vector<1x8x128xf32>,
    } else {
    }
    %c0 = arith.constant 0 : index
    %c0_1 = arith.constant 0 : index
    %3 = vector.load %arg2[%c0, %c0_1] : memref<8x128xf32, #tpu.memory_space<vmem>>, vector<8x128xf32>
    %c0_2 = arith.constant 0 : index
    %c0_3 = arith.constant 0 : index
    %4 = vector.load %arg3[%c0_2, %c0_3] : memref<8x128xf32, #tpu.memory_space<vmem>>, vector<8x128xf32>
    %cst = arith.constant 0.000000e+00 : f32
    %5 = vector.broadcast %cst : f32 to vector<8x128xf32>
    %6 = arith.cmpf olt, %3, %5 : vector<8x128xf32>
    %cst_4 = arith.constant 5.000000e-01 : f32
    %7 = vector.broadcast %cst_4 : f32 to vector<8x128xf32>
    %8 = arith.cmpf ogt, %4, %7 : vector<8x128xf32>
    %9 = arith.andi %6, %8 : vector<8x128xi1>
    %cst_5 = arith.constant 0.000000e+00 : f32
    %10 = vector.broadcast %cst_5 : f32 to vector<8x128xf32>
    %11 = arith.cmpf ogt, %3, %10 : vector<8x128xf32>
    %cst_6 = arith.constant 5.000000e-01 : f32
    %12 = vector.broadcast %cst_6 : f32 to vector<8x128xf32>
    %13 = arith.cmpf olt, %4, %12 : vector<8x128xf32>
    %14 = arith.andi %11, %13 : vector<8x128xi1>
    %15 = arith.ori %9, %14 : vector<8x128xi1>
    %16 = math.absf %3 : vector<8x128xf32>
    %cst_7 = arith.constant 0.000000e+00 : f32
    %17 = vector.broadcast %cst_7 : f32 to vector<8x128xf32>
    %18 = arith.subf %17, %16 : vector<8x128xf32>
    %19 = math.exp %18 : vector<8x128xf32>
    %20 = math.log1p %19 : vector<8x128xf32>
    %cst_8 = arith.constant 0.000000e+00 : f32
    %21 = vector.broadcast %cst_8 : f32 to vector<8x128xf32>
    %22 = arith.subf %21, %3 : vector<8x128xf32>
    %cst_9 = arith.constant 0.000000e+00 : f32
    %23 = vector.broadcast %cst_9 : f32 to vector<8x128xf32>
    %24 = arith.maximumf %22, %23 : vector<8x128xf32>
    %25 = arith.addf %24, %20 : vector<8x128xf32>
    %cst_10 = arith.constant 0.000000e+00 : f32
    %26 = vector.broadcast %cst_10 : f32 to vector<8x128xf32>
    %27 = arith.subf %26, %25 : vector<8x128xf32>
    %cst_11 = arith.constant -1.000000e+02 : f32
    %28 = vector.broadcast %cst_11 : f32 to vector<8x128xf32>
    %29 = arith.maximumf %27, %28 : vector<8x128xf32>
    %cst_12 = arith.constant 0.000000e+00 : f32
    %30 = vector.broadcast %cst_12 : f32 to vector<8x128xf32>
    %31 = arith.maximumf %3, %30 : vector<8x128xf32>
    %32 = arith.addf %31, %20 : vector<8x128xf32>
    %cst_13 = arith.constant 0.000000e+00 : f32
    %33 = vector.broadcast %cst_13 : f32 to vector<8x128xf32>
    %34 = arith.subf %33, %32 : vector<8x128xf32>
    %cst_14 = arith.constant -1.000000e+02 : f32
    %35 = vector.broadcast %cst_14 : f32 to vector<8x128xf32>
    %36 = arith.maximumf %34, %35 : vector<8x128xf32>
    %37 = arith.mulf %4, %29 : vector<8x128xf32>
    %cst_15 = arith.constant 1.000000e+00 : f32
    %38 = vector.broadcast %cst_15 : f32 to vector<8x128xf32>
    %39 = arith.subf %38, %4 : vector<8x128xf32>
    %40 = arith.mulf %39, %36 : vector<8x128xf32>
    %41 = arith.addf %37, %40 : vector<8x128xf32>
    %cst_16 = arith.constant 0.000000e+00 : f32
    %42 = vector.broadcast %cst_16 : f32 to vector<8x128xf32>
    %43 = arith.subf %42, %41 : vector<8x128xf32>
    %cst_17 = arith.constant 0.000000e+00 : f32
    %44 = vector.broadcast %cst_17 : f32 to vector<8x128xf32>
    %45 = arith.select %15, %43, %44 : vector<8x128xi1>, vector<8x128xf32>
    %c0_18 = arith.constant 0 : index
    %c0_19 = arith.constant 0 : index
    %c0_20 = arith.constant 0 : index
    %46 = vector.load %arg4[%c0_18, %c0_19, %c0_20] : memref<1x8x128xf32, #tpu.memory_space<vmem>>, vector<1x8x128xf32>
    %47 = vector.shape_cast %46 : vector<1x8x128xf32> to vector<8x128xf32>
    %48 = vector.shape_cast %45 : vector<8x128xf32> to vector<1x8x128xf32>
    %cst_21 = arith.constant dense<0.000000e+00> : vector<8x128xf32>
    %49 = vector.multi_reduction <add>, %48, %cst_21 [0] : vector<1x8x128xf32> to vector<8x128xf32>
    %50 = arith.addf %47, %49 : vector<8x128xf32>
    %c0_22 = arith.constant 0 : index
    %c0_23 = arith.constant 0 : index
    %c0_24 = arith.constant 0 : index
    %51 = vector.load %arg4[%c0_22, %c0_23, %c0_24] : memref<1x8x128xf32, #tpu.memory_space<vmem>>, vector<1x8x128xf32>
    %52 = vector.shape_cast %51 : vector<1x8x128xf32> to vector<8x128xf32>
    %53 = vector.shape_cast %50 : vector<8x128xf32> to vector<1x8x128xf32>
    tpu.vector_store %arg4[%c0_22, %c0_23, %c0_24], %53 {strides = array<i32>} : memref<1x8x128xf32, #tpu.memory_space<vmem>>, vector<1x8x128xf32>,
    return
  }
  func.func @transform_0(%arg0: i32, %arg1: i32) -> (i32, i32) {
    %c1_i32 = arith.constant 1 : i32
    %0 = arith.muli %arg0, %c1_i32 : i32
    %1 = arith.addi %0, %arg1 : i32
    %c0_i32 = arith.constant 0 : i32
    %c0_i32_0 = arith.constant 0 : i32
    return %1, %c0_i32 : i32, i32
  }
  func.func @transform_1(%arg0: i32, %arg1: i32) -> (i32, i32) {
    %c1_i32 = arith.constant 1 : i32
    %0 = arith.muli %arg0, %c1_i32 : i32
    %1 = arith.addi %0, %arg1 : i32
    %c0_i32 = arith.constant 0 : i32
    %c0_i32_0 = arith.constant 0 : i32
    return %1, %c0_i32 : i32, i32
  }
  func.func @transform_2(%arg0: i32, %arg1: i32) -> (i32, i32, i32) {
    %c0_i32 = arith.constant 0 : i32
    %c0_i32_0 = arith.constant 0 : i32
    %c0_i32_1 = arith.constant 0 : i32
    return %arg0, %c0_i32, %c0_i32_0 : i32, i32, i32
  }
}

</mosaic_0001>

<llo_original>
// kernel: tpu_custom_call.1
$region0: #{tpu_custom_call.1}
  #allocation0 [shape = 'u32[]', space=smem, size = 0x4, offset = 0x4, fixed_abs, tag = 'smem constant byte address 0x4 - core index']
  #allocation1 [shape = 'u32[144,128]{1,0:T(1,128)}', space=vmem, size = 0x12000, scoped, tag = 'internal scratch']
  %s0 = inlined_call_operand.hbm [shape: f32[16,128], index: 0, kind: input, shape index: {}]
  %s1 = inlined_call_operand.hbm [shape: f32[16,128], index: 1, kind: input, shape index: {}]
  %s2 = inlined_call_operand.hbm [shape: f32[2,8,128], index: 2, kind: output, shape index: {}]
  %s3 = sld [smem:[#allocation0]]
  $region53: #{tpu_custom_call.1} parent=0
    _
  %s5 = ssub.s32 1, %s3
  %s6 = scalar_select 0, %s5, %s3
  $region1: #{tpu_custom_call.1} parent=0
    #allocation2 [shape = 'u8[8192]{0}', space=vmem, size = 0x2000, scoped, tag = 'input window, operand 0']
    #allocation3 [shape = 's32[2]{0}', space=sflag, size = 0x8, scoped, tag = 'scoped memory for tpu_custom_call.1']
    #allocation4 [shape = 's32[2]{0}', space=sflag, size = 0x8, scoped, tag = 'scoped memory for tpu_custom_call.1']
    #allocation5 [shape = 'u8[8192]{0}', space=vmem, size = 0x2000, scoped, tag = 'input window, operand 1']
    #allocation6 [shape = 's32[2]{0}', space=sflag, size = 0x8, scoped, tag = 'scoped memory for tpu_custom_call.1']
    #allocation7 [shape = 'u8[8192]{0}', space=vmem, size = 0x2000, scoped, tag = 'output window, operand 0']
    %7 = vsyncpa [#allocation3], 0
    %s8 = scalar_lea.sflag [#allocation3], 1
    %9 = vsyncpa %s8, 0
    %10 = vsyncpa [#allocation6], 0
    %s11 = scalar_lea.sflag [#allocation6], 1
    %12 = vsyncpa %s11, 0
    %13 = vsyncpa [#allocation4], 0
    %s14 = scalar_lea.sflag [#allocation4], 1
    %15 = vsyncpa %s14, 0
    loop: start=0, step=1, limit=4
    $region2: #{tpu_custom_call.1} parent=1 // loop_pre_header
      _
    $region3: #{tpu_custom_call.1} parent=1 // loop_header
      %s17 = sphi 0, %s21
      %p18 = scmp.ge.s32.totalorder %s17, 4
      %s24 = sphi 0, %s36
      %s25 = sphi 0, %s32
      %s26 = sphi 0, %s24
      %s27 = sphi 0, %s25
      %s28 = sphi 0, %s26
      %s29 = sphi 0, %s27
      %s41 = sphi 0, %s43
      %s44 = sphi 0, %s41
      %s45 = sphi 0, %s44
      %s61 = sphi 0, %s45
      %s69 = sphi 0, %s71
      %s72 = sphi 0, %s69
      %s73 = sphi 0, %s72
      %s89 = sphi 0, %s73
      %s95 = sphi 0, %s97
      %s98 = sphi 0, %s95
      %s99 = sphi 0, %s98
      %s115 = sphi 0, %s99
    $region4: #{tpu_custom_call.1} parent=1 // loop_header_branch
      %20 = sbr.rel (%p18) target = $region8
    $region5: #{tpu_custom_call.1} parent=1 // loop_body
      %s22 = ssub.s32 %s17, 1
      %s23 = ssub.s32 %s17, 2
      %s30 = sadd.s32 1, %s25
      %p31 = scmp.ge.s32.totalorder %s30, 1
      %s32 = scalar_select %p31, 0, %s30
      %s33 = sadd.s32 1, %s24
      %s34 = scalar_select %p31, %s33, %s24
      %p35 = scmp.ge.s32.totalorder %s34, 2
      %s36 = scalar_select %p35, 0, %s34
      %s37 = sadd.s32 %s24, %s25
      %s38 = sadd.s32 %s36, %s32
      %s39 = ssub.s32 %s37, %s38
      %p40 = scmp.eq.s32.totalorder %s39, 0
      %s42 = sadd.s32 %s41, 1
      %s43 = scalar_select %p40, %s41, %s42
      %p46 = pneg %p40
      %p47 = scmp.eq.s32.totalorder %s17, 1
      %p48 = por %p46, %p47
      %p49 = scmp.ne.s32.totalorder %s41, %s44
      %p50 = scmp.eq.s32.totalorder %s17, 0
      %p51 = por %p49, %p50
      %p52 = scmp.ne.s32.totalorder %s41, %s44
      %p53 = scmp.eq.s32.totalorder %s22, 1
      %p54 = por %p52, %p53
      %p55 = scmp.ne.s32.totalorder %s44, %s45
      %p56 = scmp.eq.s32.totalorder %s22, 0
      %p57 = por %p55, %p56
      %p58 = scmp.ne.s32.totalorder %s44, %s45
      %p59 = scmp.eq.s32.totalorder %s23, 1
      %p60 = por %p58, %p59
      %p62 = scmp.ne.s32.totalorder %s45, %s61
      %p63 = scmp.eq.s32.totalorder %s23, 0
      %p64 = por %p62, %p63
      %s65 = sadd.s32 %s24, %s25
      %s66 = sadd.s32 %s36, %s32
      %s67 = ssub.s32 %s65, %s66
      %p68 = scmp.eq.s32.totalorder %s67, 0
      %s70 = sadd.s32 %s69, 1
      %s71 = scalar_select %p68, %s69, %s70
      %p74 = pneg %p68
      %p75 = scmp.eq.s32.totalorder %s17, 1
      %p76 = por %p74, %p75
      %p77 = scmp.ne.s32.totalorder %s69, %s72
      %p78 = scmp.eq.s32.totalorder %s17, 0
      %p79 = por %p77, %p78
      %p80 = scmp.ne.s32.totalorder %s69, %s72
      %p81 = scmp.eq.s32.totalorder %s22, 1
      %p82 = por %p80, %p81
      %p83 = scmp.ne.s32.totalorder %s72, %s73
      %p84 = scmp.eq.s32.totalorder %s22, 0
      %p85 = por %p83, %p84
      %p86 = scmp.ne.s32.totalorder %s72, %s73
      %p87 = scmp.eq.s32.totalorder %s23, 1
      %p88 = por %p86, %p87
      %p90 = scmp.ne.s32.totalorder %s73, %s89
      %p91 = scmp.eq.s32.totalorder %s23, 0
      %p92 = por %p90, %p91
      %s93 = ssub.s32 %s24, %s36
      %p94 = scmp.eq.s32.totalorder %s93, 0
      %s96 = sadd.s32 %s95, 1
      %s97 = scalar_select %p94, %s95, %s96
      %p100 = pneg %p94
      %p101 = scmp.eq.s32.totalorder %s17, 1
      %p102 = por %p100, %p101
      %p103 = scmp.ne.s32.totalorder %s95, %s98
      %p104 = scmp.eq.s32.totalorder %s17, 0
      %p105 = por %p103, %p104
      %p106 = scmp.ne.s32.totalorder %s95, %s98
      %p107 = scmp.eq.s32.totalorder %s22, 1
      %p108 = por %p106, %p107
      %p109 = scmp.ne.s32.totalorder %s98, %s99
      %p110 = scmp.eq.s32.totalorder %s22, 0
      %p111 = por %p109, %p110
      %p112 = scmp.ne.s32.totalorder %s98, %s99
      %p113 = scmp.eq.s32.totalorder %s23, 1
      %p114 = por %p112, %p113
      %p116 = scmp.ne.s32.totalorder %s99, %s115
      %p117 = scmp.eq.s32.totalorder %s23, 0
      %p118 = por %p116, %p117
      %p119 = scmp.le.s32.totalorder 1, %s17
      %p120 = scmp.lt.s32.totalorder %s17, 3
      %p121 = pnand %p119, %p120
      %p122 = pneg %p121
      // Predicated region
      $region9: #{tpu_custom_call.1} parent=5 // pred_check
        _
      $region10: #{tpu_custom_call.1} parent=5 // pred_check_branch
        %124 = sbr.rel (%p121) target = $region12
      $region11: #{tpu_custom_call.1} parent=5 // pred_region
        %s125 = ssub.s32 %s17, 1
      $region12: #{tpu_custom_call.1} parent=5 // pred_fallthru
        _
      %p126 = scmp.lt.s32.totalorder %s17, 2
      // Predicated region
      $region13: #{tpu_custom_call.1} parent=5 // pred_check
        %p127 = pneg %p126
      $region14: #{tpu_custom_call.1} parent=5 // pred_check_branch
        %129 = sbr.rel (%p127) target = $region16
      $region15: #{tpu_custom_call.1} parent=5 // pred_region
        // Predicated region
        $region17: #{tpu_custom_call.1} parent=15 // pred_check
          %p130 = pneg %p51
        $region18: #{tpu_custom_call.1} parent=15 // pred_check_branch
          %132 = sbr.rel (%p130) target = $region20
        $region19: #{tpu_custom_call.1} parent=15 // pred_region
          %s133 = sand.u32 %s41, 1
          %s134 = scalar_lea.sflag [#allocation3], %s133
          %s135 = sand.u32 %s41, 1
          %s136 = smul.addr %s135, 8
          %s137 = scalar_lea.vmem [#allocation2], %s136
          %s138 = sadd.s32 %s24, %s25
          %s140 = ssub.s32 128, 128
          %141 = vsyncadd %s134, %s140
          %s142 = smul.addr %s138, 128
          %s143 = scalar_lea.hbm %s0, %s142
          %s145 = sshll.u32 %s137, 4
          %s146 = int_to_ptr.vmem [resolvable:$true] %s145
          %148 = dma.hbm_to_vmem [thread:$0]  %s143, 128, %s146, %s134
        $region20: #{tpu_custom_call.1} parent=15 // pred_fallthru
          _
        // Predicated region
        $region21: #{tpu_custom_call.1} parent=15 // pred_check
          %p149 = pneg %p79
        $region22: #{tpu_custom_call.1} parent=15 // pred_check_branch
          %151 = sbr.rel (%p149) target = $region24
        $region23: #{tpu_custom_call.1} parent=15 // pred_region
          %s152 = sand.u32 %s69, 1
          %s153 = scalar_lea.sflag [#allocation6], %s152
          %s154 = sand.u32 %s69, 1
          %s155 = smul.addr %s154, 8
          %s156 = scalar_lea.vmem [#allocation5], %s155
          %s157 = sadd.s32 %s24, %s25
          %s159 = ssub.s32 128, 128
          %160 = vsyncadd %s153, %s159
          %s161 = smul.addr %s157, 128
          %s162 = scalar_lea.hbm %s1, %s161
          %s164 = sshll.u32 %s156, 4
          %s165 = int_to_ptr.vmem [resolvable:$true] %s164
          %167 = dma.hbm_to_vmem [thread:$0]  %s162, 128, %s165, %s153
        $region24: #{tpu_custom_call.1} parent=15 // pred_fallthru
          _
      $region16: #{tpu_custom_call.1} parent=5 // pred_fallthru
        _
      %p168 = scmp.le.s32.totalorder 1, %s17
      %p169 = scmp.lt.s32.totalorder %s17, 3
      %p170 = pnand %p168, %p169
      %p171 = pneg %p170
      // Predicated region
      $region25: #{tpu_custom_call.1} parent=5 // pred_check
        _
      $region26: #{tpu_custom_call.1} parent=5 // pred_check_branch
        %173 = sbr.rel (%p170) target = $region28
      $region27: #{tpu_custom_call.1} parent=5 // pred_region
        %s174 = ssub.s32 %s17, 1
        %s175 = sand.u32 %s44, 1
        %s176 = scalar_lea.sflag [#allocation3], %s175
        %s177 = sand.u32 %s44, 1
        %s178 = smul.addr %s177, 8
        %s179 = scalar_lea.vmem [#allocation2], %s178
        // Predicated region
        $region29: #{tpu_custom_call.1} parent=27 // pred_check
          %p180 = pneg %p57
        $region30: #{tpu_custom_call.1} parent=27 // pred_check_branch
          %182 = sbr.rel (%p180) target = $region32
        $region31: #{tpu_custom_call.1} parent=27 // pred_region
          %183 = dma.done %s176, 128
        $region32: #{tpu_custom_call.1} parent=27 // pred_fallthru
          _
        %s184 = sand.u32 %s72, 1
        %s185 = scalar_lea.sflag [#allocation6], %s184
        %s186 = sand.u32 %s72, 1
        %s187 = smul.addr %s186, 8
        %s188 = scalar_lea.vmem [#allocation5], %s187
        // Predicated region
        $region33: #{tpu_custom_call.1} parent=27 // pred_check
          %p189 = pneg %p85
        $region34: #{tpu_custom_call.1} parent=27 // pred_check_branch
          %191 = sbr.rel (%p189) target = $region36
        $region35: #{tpu_custom_call.1} parent=27 // pred_region
          %192 = dma.done %s185, 128
        $region36: #{tpu_custom_call.1} parent=27 // pred_fallthru
          _
        %s193 = sand.u32 %s44, 1
        %s194 = scalar_lea.sflag [#allocation3], %s193
        %s195 = sand.u32 %s44, 1
        %s196 = smul.addr %s195, 8
        %s197 = scalar_lea.vmem [#allocation2], %s196
        %p198 = pneg %p57
        %p199 = pneg %p54
        %s200 = sand.u32 %s72, 1
        %s201 = scalar_lea.sflag [#allocation6], %s200
        %s202 = sand.u32 %s72, 1
        %s203 = smul.addr %s202, 8
        %s204 = scalar_lea.vmem [#allocation5], %s203
        %p205 = pneg %p85
        %p206 = pneg %p82
        %p207 = pneg %p111
        %p208 = pneg %p108
        %s209 = sand.u32 %s98, 1
        %s210 = scalar_lea.sflag [#allocation4], %s209
        %s211 = sand.u32 %s98, 1
        %s212 = smul.addr %s211, 8
        %s213 = scalar_lea.vmem [#allocation7], %s212
        %s214 = sadd.s32 %s26, %s27
        %s215 = sadd.s32 %s26, %s27
        %p216 = scmp.eq.s32.totalorder %s27, 0
        // Predicated region
        $region37: #{tpu_custom_call.1} parent=27 // pred_check
          %p217 = pneg %p216
        $region38: #{tpu_custom_call.1} parent=27 // pred_check_branch
          %219 = sbr.rel (%p217) target = $region40
        $region39: #{tpu_custom_call.1} parent=27 // pred_region
          %220 = vst [vmem:[%s213] sm:$0xff] 0.0
        $region40: #{tpu_custom_call.1} parent=27 // pred_fallthru
          _
        %v221 = vld [vmem:[%s179] sm:$0xff]
        %v222 = vld [vmem:[%s188] sm:$0xff]
        %vm223 = vcmp.lt.f32.partialorder %v221, 0.0
        %vm224 = vcmp.gt.f32.partialorder %v222, 0.5
        %vm225 = vmand %vm223, %vm224
        %vm226 = vcmp.gt.f32.partialorder %v221, 0.0
        %vm227 = vcmp.lt.f32.partialorder %v222, 0.5
        %vm228 = vmand %vm226, %vm227
        %vm229 = vmor %vm225, %vm228
        %v230 = vand.u32 2147483647, %v221
        %v231 = vsub.f32 0.0, %v230
        %v232 = vmul.f32 %v231, 1.442695
        %v233 = vpow.pop %v232
        %v234 = vadd.f32 %v233, 1.0
        %v235 = vlog2.pop %v234
        %v236 = vmul.f32 %v235, 0.6931472
        %v237 = vmul.f32 -0.5, %v233
        %v238 = vadd.f32 %v237, 1.0
        %v239 = vmul.f32 %v238, %v233
        %v240 = vand.u32 2147483647, %v233
        %vm241 = vcmp.lt.f32.partialorder %v240, 0.0004427343
        %v242 = vsel %vm241, %v239, %v236
        %v243 = vsub.f32 0.0, %v221
        %v244 = vmax.f32 %v243, 0.0
        %v245 = vadd.f32 %v244, %v242
        %v246 = vsub.f32 0.0, %v245
        %v247 = vmax.f32 %v246, -100.0
        %v248 = vmax.f32 %v221, 0.0
        %v249 = vadd.f32 %v248, %v242
        %v250 = vsub.f32 0.0, %v249
        %v251 = vmax.f32 %v250, -100.0
        %v252 = vmul.f32 %v222, %v247
        %v253 = vsub.f32 1.0, %v222
        %v254 = vmul.f32 %v253, %v251
        %v255 = vadd.f32 %v252, %v254
        %v256 = vsub.f32 0.0, %v255
        %v257 = vsel %vm229, %v256, 0.0
        %v258 = vld [vmem:[%s213] sm:$0xff]
        %v259 = vadd.f32 %v257, 0.0
        %v260 = vadd.f32 %v258, %v259
        %261 = vst [vmem:[%s213] sm:$0xff] %v260
        %s262 = sand.u32 %s98, 1
        %s263 = scalar_lea.sflag [#allocation4], %s262
        %s264 = sand.u32 %s98, 1
        %s265 = smul.addr %s264, 8
        %s266 = scalar_lea.vmem [#allocation7], %s265
        // Predicated region
        $region41: #{tpu_custom_call.1} parent=27 // pred_check
          %p267 = pneg %p108
        $region42: #{tpu_custom_call.1} parent=27 // pred_check_branch
          %269 = sbr.rel (%p267) target = $region44
        $region43: #{tpu_custom_call.1} parent=27 // pred_region
          %s271 = ssub.s32 128, 128
          %272 = vsyncadd %s263, %s271
          %s273 = smul.addr %s26, 128
          %s274 = scalar_lea.hbm %s2, %s273
          %s276 = sshll.u32 %s266, 4
          %s277 = int_to_ptr.vmem [resolvable:$true] %s276
          %279 = dma.vmem_to_hbm [thread:$0]  %s277, 128, %s274, %s263
        $region44: #{tpu_custom_call.1} parent=27 // pred_fallthru
          _
      $region28: #{tpu_custom_call.1} parent=5 // pred_fallthru
        _
      %p280 = scmp.le.s32.totalorder 2, %s17
      // Predicated region
      $region45: #{tpu_custom_call.1} parent=5 // pred_check
        %p281 = pneg %p280
      $region46: #{tpu_custom_call.1} parent=5 // pred_check_branch
        %283 = sbr.rel (%p281) target = $region48
      $region47: #{tpu_custom_call.1} parent=5 // pred_region
        %s284 = ssub.s32 %s17, 2
        // Predicated region
        $region49: #{tpu_custom_call.1} parent=47 // pred_check
          %p285 = pneg %p114
        $region50: #{tpu_custom_call.1} parent=47 // pred_check_branch
          %287 = sbr.rel (%p285) target = $region52
        $region51: #{tpu_custom_call.1} parent=47 // pred_region
          %s288 = sand.u32 %s99, 1
          %s289 = scalar_lea.sflag [#allocation4], %s288
          %s290 = sand.u32 %s99, 1
          %s291 = smul.addr %s290, 8
          %s292 = scalar_lea.vmem [#allocation7], %s291
          %293 = dma.done %s289, 128
        $region52: #{tpu_custom_call.1} parent=47 // pred_fallthru
          _
      $region48: #{tpu_custom_call.1} parent=5 // pred_fallthru
        _
    $region6: #{tpu_custom_call.1} parent=1 // loop_footer
      %s21 = sadd.s32 1, %s17
    $region7: #{tpu_custom_call.1} parent=1 // loop_footer_branch
      %16 = sbr.rel target = $region3
    $region8: #{tpu_custom_call.1} parent=1 // loop_exit
      _
    %294 = vsyncpa [#allocation3], 1
    %s295 = scalar_lea.sflag [#allocation3], 1
    %296 = vsyncpa %s295, 1
    %297 = vsyncpa [#allocation6], 1
    %s298 = scalar_lea.sflag [#allocation6], 1
    %299 = vsyncpa %s298, 1
    %300 = vsyncpa [#allocation4], 1
    %s301 = scalar_lea.sflag [#allocation4], 1
    %302 = vsyncpa %s301, 1

</llo_original>
